<compile_context>
chip_gen: v6e
topology: v6e:2x2x1
jax: 0.10.0
libtpu: 0.0.40
codegen_flags: <defaults>
</compile_context>

<pallas_src>
import jax
import jax.numpy as jnp
from jax.experimental import pallas as pl
from jax.experimental.pallas import tpu as pltpu


def _round_up(x, m):
    return ((x + m - 1) // m) * m


def _sigmoid(x):
    # tanh-based sigmoid: one EUP tanh + cheap VPU mul/add, no inf intermediates,
    # no f32 divide (which lowers to EUP reciprocal + Newton-Raphson VPU iters).
    return 0.5 * jnp.tanh(0.5 * x) + 0.5


def sigmoid_boxes_kernel(w_ref, W_ref, z_ref, Z_ref):
    w = w_ref[...].astype(jnp.float32)       # (block_rows, lane_cols)
    Wb = W_ref[...].astype(jnp.float32)
    z = _sigmoid(w)                          # min corner in (0, 1)
    Z = z + _sigmoid(Wb) * (1.0 - z)         # max corner in (z, 1)
    z_ref[...] = z.astype(z_ref.dtype)
    Z_ref[...] = Z.astype(Z_ref.dtype)


def sigmoid_boxes_forward(w, W, box_indices=None, *, lane_cols=512,
                          max_block_rows=512, io_dtype=None):
    """JAX/Pallas equivalent of SigmoidBoxes.forward(box_indices).

    w, W: (num_models, num_boxes, dims) real-valued parameters.
    box_indices: optional 1-D int array of box ids (None -> all boxes).
    io_dtype: optional narrower dtype (e.g. jnp.bfloat16) for kernel I/O;
              compute stays f32. None -> f32 I/O.
    Returns: (num_models, P, 2, dims); min corner at [..., 0, :], max at [..., 1, :].
    """
    assert lane_cols % 128 == 0
    w = w.astype(jnp.float32)
    W = W.astype(jnp.float32)
    M, N, D = w.shape

    # Glue: gather the selected boxes (elementwise math commutes with the gather).
    # With allow_input_fusion this gather/pad does not get materialized in HBM.
    if box_indices is not None:
        w_sel = jnp.take(w, box_indices, axis=1)     # (M, P, D)
        W_sel = jnp.take(W, box_indices, axis=1)
        P = int(box_indices.shape[0])
    else:
        w_sel, W_sel = w, W
        P = N

    slab_dtype = jnp.dtype(io_dtype) if io_dtype is not None else jnp.dtype(jnp.float32)
    itemsize = slab_dtype.itemsize
    row_align = 8 * max(1, 4 // itemsize)            # (8,128) f32, (16,128) bf16, ...

    # Lane-dense flattening + padding to full tile-aligned slabs.
    T = M * P * D
    rows = pl.cdiv(T, lane_cols)

    block_rows = min(_round_up(max_block_rows, row_align), _round_up(rows, row_align))
    # Keep at least 2 grid steps when the problem allows so the "parallel"
    # grid axis can be sharded across both v7x TensorCores.
    if rows > row_align:
        block_rows = max(row_align,
                         min(block_rows, _round_up(pl.cdiv(rows, 2), row_align)))

    rows_p = _round_up(rows, block_rows)
    Tp = rows_p * lane_cols
    num_blocks = rows_p // block_rows

    def prep(x):
        xf = x.reshape(-1)
        xf = jnp.pad(xf, (0, Tp - T))
        return xf.reshape(rows_p, lane_cols).astype(slab_dtype)

    w_flat = prep(w_sel)
    W_flat = prep(W_sel)

    spec = pl.BlockSpec((block_rows, lane_cols), lambda i: (i, 0))

    # 2 inputs + 2 outputs, double-buffered, plus headroom for compiler scratch.
    block_bytes = block_rows * lane_cols * itemsize
    vmem_limit = int(min(128 << 20, 2 * 4 * block_bytes + (4 << 20)))

    cost = pl.CostEstimate(
        flops=8 * Tp,                     # muls/adds around the two sigmoids
        transcendentals=2 * Tp,           # two tanh per element
        bytes_accessed=4 * itemsize * Tp, # 2 inputs + 2 outputs
    )

    z_flat, Z_flat = pl.pallas_call(
        sigmoid_boxes_kernel,
        out_shape=(
            jax.ShapeDtypeStruct((rows_p, lane_cols), slab_dtype),
            jax.ShapeDtypeStruct((rows_p, lane_cols), slab_dtype),
        ),
        grid=(num_blocks,),
        in_specs=[spec, spec],
        out_specs=(spec, spec),
        compiler_params=pltpu.CompilerParams(
            dimension_semantics=("parallel",),
            vmem_limit_bytes=vmem_limit,
            allow_input_fusion=[True, True],
        ),
        cost_estimate=cost,
    )(w_flat, W_flat)

    # Layout plumbing back to the torch output layout (M, P, 2, D), done once as
    # a single fused slice+reshape+stack inside the same jitted computation.
    z = z_flat.reshape(-1)[:T].reshape(M, P, D)
    Z = Z_flat.reshape(-1)[:T].reshape(M, P, D)
    return jnp.stack((z, Z), axis=-2).astype(jnp.float32)


if __name__ == "__main__":
    key = jax.random.PRNGKey(0)
    k1, k2, k3 = jax.random.split(key, 3)

    num_models, num_boxes, dims, num_idx = 2, 16, 8, 8

    # Deterministic parameter construction mirroring SigmoidBoxes._from_UnitBoxes:
    # start from valid unit-cube boxes (z, Z) and invert the sigmoid parametrization.
    # TODO(synk): the Gibbs-sampling init of initialize_boxes_in_unit_cube is init-time
    # host code, not part of the forward pass; a simple uniform init is used here.
    z0 = jax.random.uniform(k1, (num_models, num_boxes, dims), minval=0.05, maxval=0.70)
    side = jax.random.uniform(k2, (num_models, num_boxes, dims),
                              minval=0.05, maxval=0.25) * (1.0 - z0)
    Z0 = z0 + side
    l = (Z0 - z0) / (1.0 - z0)
    w_param = jnp.log(z0 / (1.0 - z0))          # logit(z)
    W_param = jnp.log(l / (1.0 - l))            # logit((Z - z)/(1 - z))

    box_indices = jax.random.randint(k3, (num_idx,), 0, num_boxes)

    fwd = jax.jit(sigmoid_boxes_forward)        # jit so input fusion / stack fuse
    out = fwd(w_param, W_param, box_indices)
    out = jax.block_until_ready(out)

    # Reference check against plain-JAX forward semantics.
    z_ref = jax.nn.sigmoid(w_param[:, box_indices])
    Z_ref = z_ref + jax.nn.sigmoid(W_param[:, box_indices]) * (1.0 - z_ref)
    ref = jnp.stack((z_ref, Z_ref), axis=-2)
    assert out.shape == (num_models, num_idx, 2, dims)
    assert bool(jnp.allclose(out, ref, rtol=1e-5, atol=1e-5))

    print("KERNEL_OK")
</pallas_src>

<mosaic_0001>
module attributes {stable_mosaic.version = 11 : i64} {
  func.func @sigmoid_boxes_kernel(%arg0: i32, %arg1: memref<8x512xf32, #tpu.memory_space<vmem>>, %arg2: memref<8x512xf32, #tpu.memory_space<vmem>>, %arg3: memref<8x512xf32, #tpu.memory_space<vmem>>, %arg4: memref<8x512xf32, #tpu.memory_space<vmem>>) attributes {dimension_semantics = [#tpu.dimension_semantics<parallel>], iteration_bounds = array<i64: 1>, scalar_prefetch = 0 : i64, scratch_operands = 0 : i64, tpu.core_type = #tpu.core_type<tc>, window_params = [{transform_indices = @transform_0, window_bounds = array<i64: 8, 512>}, {transform_indices = @transform_1, window_bounds = array<i64: 8, 512>}, {transform_indices = @transform_2, window_bounds = array<i64: 8, 512>}, {transform_indices = @transform_3, window_bounds = array<i64: 8, 512>}]} {
    %c0 = arith.constant 0 : index
    %c0_0 = arith.constant 0 : index
    %0 = vector.load %arg1[%c0, %c0_0] : memref<8x512xf32, #tpu.memory_space<vmem>>, vector<8x512xf32>
    %c0_1 = arith.constant 0 : index
    %c0_2 = arith.constant 0 : index
    %1 = vector.load %arg2[%c0_1, %c0_2] : memref<8x512xf32, #tpu.memory_space<vmem>>, vector<8x512xf32>
    %cst = arith.constant 5.000000e-01 : f32
    %2 = vector.broadcast %cst : f32 to vector<8x512xf32>
    %3 = arith.mulf %2, %0 : vector<8x512xf32>
    %4 = math.tanh %3 : vector<8x512xf32>
    %cst_3 = arith.constant 5.000000e-01 : f32
    %5 = vector.broadcast %cst_3 : f32 to vector<8x512xf32>
    %6 = arith.mulf %5, %4 : vector<8x512xf32>
    %cst_4 = arith.constant 5.000000e-01 : f32
    %7 = vector.broadcast %cst_4 : f32 to vector<8x512xf32>
    %8 = arith.addf %6, %7 : vector<8x512xf32>
    %cst_5 = arith.constant 5.000000e-01 : f32
    %9 = vector.broadcast %cst_5 : f32 to vector<8x512xf32>
    %10 = arith.mulf %9, %1 : vector<8x512xf32>
    %11 = math.tanh %10 : vector<8x512xf32>
    %cst_6 = arith.constant 5.000000e-01 : f32
    %12 = vector.broadcast %cst_6 : f32 to vector<8x512xf32>
    %13 = arith.mulf %12, %11 : vector<8x512xf32>
    %cst_7 = arith.constant 5.000000e-01 : f32
    %14 = vector.broadcast %cst_7 : f32 to vector<8x512xf32>
    %15 = arith.addf %13, %14 : vector<8x512xf32>
    %cst_8 = arith.constant 1.000000e+00 : f32
    %16 = vector.broadcast %cst_8 : f32 to vector<8x512xf32>
    %17 = arith.subf %16, %8 : vector<8x512xf32>
    %18 = arith.mulf %15, %17 : vector<8x512xf32>
    %19 = arith.addf %8, %18 : vector<8x512xf32>
    %c0_9 = arith.constant 0 : index
    %c0_10 = arith.constant 0 : index
    %20 = vector.load %arg3[%c0_9, %c0_10] : memref<8x512xf32, #tpu.memory_space<vmem>>, vector<8x512xf32>
    tpu.vector_store %arg3[%c0_9, %c0_10], %8 {strides = array<i32>} : memref<8x512xf32, #tpu.memory_space<vmem>>, vector<8x512xf32>,
    %c0_11 = arith.constant 0 : index
    %c0_12 = arith.constant 0 : index
    %21 = vector.load %arg4[%c0_11, %c0_12] : memref<8x512xf32, #tpu.memory_space<vmem>>, vector<8x512xf32>
    tpu.vector_store %arg4[%c0_11, %c0_12], %19 {strides = array<i32>} : memref<8x512xf32, #tpu.memory_space<vmem>>, vector<8x512xf32>,
    return
  }
  func.func @transform_0(%arg0: i32) -> (i32, i32) {
    %c0_i32 = arith.constant 0 : i32
    %c0_i32_0 = arith.constant 0 : i32
    return %arg0, %c0_i32 : i32, i32
  }
  func.func @transform_1(%arg0: i32) -> (i32, i32) {
    %c0_i32 = arith.constant 0 : i32
    %c0_i32_0 = arith.constant 0 : i32
    return %arg0, %c0_i32 : i32, i32
  }
  func.func @transform_2(%arg0: i32) -> (i32, i32) {
    %c0_i32 = arith.constant 0 : i32
    %c0_i32_0 = arith.constant 0 : i32
    return %arg0, %c0_i32 : i32, i32
  }
  func.func @transform_3(%arg0: i32) -> (i32, i32) {
    %c0_i32 = arith.constant 0 : i32
    %c0_i32_0 = arith.constant 0 : i32
    return %arg0, %c0_i32 : i32, i32
  }
}

</mosaic_0001>

<llo_original>
// kernel: sigmoid_boxes_forward.1
$region0: #{sigmoid_boxes_forward.1}
  #allocation0 [shape = 'u32[]', space=smem, size = 0x4, offset = 0x4, fixed_abs, tag = 'smem constant byte address 0x4 - core index']
  #allocation1 [shape = 'u32[144,128]{1,0:T(1,128)}', space=vmem, size = 0x12000, scoped, tag = 'internal scratch']
  %s0 = inlined_call_operand.vmem [shape: f32[8,512], index: 0, kind: input, shape index: {}]
  %s1 = inlined_call_operand.vmem [shape: f32[8,512], index: 1, kind: input, shape index: {}]
  %s2 = inlined_call_operand.vmem [shape: f32[8,512], index: 2, kind: output, shape index: {0}]
  %s3 = inlined_call_operand.vmem [shape: f32[8,512], index: 3, kind: output, shape index: {1}]
  %4 = xla_tuple %s2, %s3
  %s5 = sld [smem:[#allocation0]]
  $region26: #{sigmoid_boxes_forward.1} parent=0
    _
  %s7 = ssub.s32 1, %s5
  %s8 = scalar_select 0, %s7, %s5
  // Predicated region
  $region2: #{sigmoid_boxes_forward.1} parent=0 // pred_check
    _
  $region3: #{sigmoid_boxes_forward.1} parent=0 // pred_check_branch
    %10 = sbr.rel (0) target = $region5
  $region4: #{sigmoid_boxes_forward.1} parent=0 // pred_region
    _
  $region5: #{sigmoid_boxes_forward.1} parent=0 // pred_fallthru
    _
  // Predicated region
  $region6: #{sigmoid_boxes_forward.1} parent=0 // pred_check
    _
  $region7: #{sigmoid_boxes_forward.1} parent=0 // pred_check_branch
    %12 = sbr.rel (0) target = $region9
  $region8: #{sigmoid_boxes_forward.1} parent=0 // pred_region
    _
  $region9: #{sigmoid_boxes_forward.1} parent=0 // pred_fallthru
    _
  %v13 = vld [vmem:[%s0] sm:$0xff]
  %v14 = vld [vmem:[%s0 + $0x8] sm:$0xff]
  %v15 = vld [vmem:[%s0 + $0x10] sm:$0xff]
  %v16 = vld [vmem:[%s0 + $0x18] sm:$0xff]
  %v17 = vld [vmem:[%s1] sm:$0xff]
  %v18 = vld [vmem:[%s1 + $0x8] sm:$0xff]
  %v19 = vld [vmem:[%s1 + $0x10] sm:$0xff]
  %v20 = vld [vmem:[%s1 + $0x18] sm:$0xff]
  %v21 = vmul.f32 %v13, 0.5
  %v22 = vmul.f32 %v14, 0.5
  %v23 = vmul.f32 %v15, 0.5
  %v24 = vmul.f32 %v16, 0.5
  %v25 = vtanh.pop %v21
  %v26 = vtanh.pop %v22
  %v27 = vtanh.pop %v23
  %v28 = vtanh.pop %v24
  %v29 = vmul.f32 %v25, 0.5
  %v30 = vmul.f32 %v26, 0.5
  %v31 = vmul.f32 %v27, 0.5
  %v32 = vmul.f32 %v28, 0.5
  %v33 = vadd.f32 %v29, 0.5
  %v34 = vadd.f32 %v30, 0.5
  %v35 = vadd.f32 %v31, 0.5
  %v36 = vadd.f32 %v32, 0.5
  %v37 = vmul.f32 %v17, 0.5
  %v38 = vmul.f32 %v18, 0.5
  %v39 = vmul.f32 %v19, 0.5
  %v40 = vmul.f32 %v20, 0.5
  %v41 = vtanh.pop %v37
  %v42 = vtanh.pop %v38
  %v43 = vtanh.pop %v39
  %v44 = vtanh.pop %v40
  %v45 = vmul.f32 %v41, 0.5
  %v46 = vmul.f32 %v42, 0.5
  %v47 = vmul.f32 %v43, 0.5
  %v48 = vmul.f32 %v44, 0.5
  %v49 = vadd.f32 %v45, 0.5
  %v50 = vadd.f32 %v46, 0.5
  %v51 = vadd.f32 %v47, 0.5
  %v52 = vadd.f32 %v48, 0.5
  %v53 = vsub.f32 1.0, %v33
  %v54 = vsub.f32 1.0, %v34
  %v55 = vsub.f32 1.0, %v35
  %v56 = vsub.f32 1.0, %v36
  %v57 = vmul.f32 %v49, %v53
  %v58 = vmul.f32 %v50, %v54
  %v59 = vmul.f32 %v51, %v55
  %v60 = vmul.f32 %v52, %v56
  %v61 = vadd.f32 %v33, %v57
  %v62 = vadd.f32 %v34, %v58
  %v63 = vadd.f32 %v35, %v59
  %v64 = vadd.f32 %v36, %v60
  %65 = vst [vmem:[%s2] sm:$0xff] %v33
  %66 = vst [vmem:[%s2 + $0x8] sm:$0xff] %v34
  %67 = vst [vmem:[%s2 + $0x10] sm:$0xff] %v35
  %68 = vst [vmem:[%s2 + $0x18] sm:$0xff] %v36
  %69 = vst [vmem:[%s3] sm:$0xff] %v61
  %70 = vst [vmem:[%s3 + $0x8] sm:$0xff] %v62
  %71 = vst [vmem:[%s3 + $0x10] sm:$0xff] %v63
  %72 = vst [vmem:[%s3 + $0x18] sm:$0xff] %v64
  // Predicated region
  $region10: #{sigmoid_boxes_forward.1} parent=0 // pred_check
    _
  $region11: #{sigmoid_boxes_forward.1} parent=0 // pred_check_branch
    %74 = sbr.rel (0) target = $region13
  $region12: #{sigmoid_boxes_forward.1} parent=0 // pred_region
    _
  $region13: #{sigmoid_boxes_forward.1} parent=0 // pred_fallthru
    _
  // Predicated region
  $region14: #{sigmoid_boxes_forward.1} parent=0 // pred_check
    _
  $region15: #{sigmoid_boxes_forward.1} parent=0 // pred_check_branch
    %76 = sbr.rel (0) target = $region17
  $region16: #{sigmoid_boxes_forward.1} parent=0 // pred_region
    _
  $region17: #{sigmoid_boxes_forward.1} parent=0 // pred_fallthru
    _
  // Predicated region
  $region18: #{sigmoid_boxes_forward.1} parent=0 // pred_check
    _
  $region19: #{sigmoid_boxes_forward.1} parent=0 // pred_check_branch
    %78 = sbr.rel (0) target = $region21
  $region20: #{sigmoid_boxes_forward.1} parent=0 // pred_region
    _
  $region21: #{sigmoid_boxes_forward.1} parent=0 // pred_fallthru
    _
  // Predicated region
  $region22: #{sigmoid_boxes_forward.1} parent=0 // pred_check
    _
  $region23: #{sigmoid_boxes_forward.1} parent=0 // pred_check_branch
    %80 = sbr.rel (0) target = $region25
  $region24: #{sigmoid_boxes_forward.1} parent=0 // pred_region
    _
  $region25: #{sigmoid_boxes_forward.1} parent=0 // pred_fallthru
    _

</llo_original>
